<compile_context>
chip_gen: v7x
topology: tpu7x:2x2x1
jax: 0.10.0
libtpu: 0.0.40
codegen_flags: <defaults>
</compile_context>

<pallas_src>
import functools

import jax
import jax.numpy as jnp
from jax.experimental import pallas as pl
from jax.experimental.pallas import tpu as pltpu


def contrastive_loss_kernel(label_ref, logit_ref, z_ref, w_ref, b_ref, mem_ref,
                            loss_ref, new_mem_ref, *,
                            momentum, inv_temperature, pred_threshold, inv_n):
    label = label_ref[...]          # (N, 1) int32
    logit = logit_ref[...]          # (N, C) f32
    z = z_ref[...]                  # (N, K) f32
    w = w_ref[...]                  # (D, K) f32  == lin.weight
    b = b_ref[...]                  # (1, D) f32
    hist_mem = mem_ref[...]         # (D, C) f32

    N, C = logit.shape

    col = jax.lax.broadcasted_iota(jnp.int32, (N, C), 1)

    # ---- one-hot label built in-kernel (fused with the mask computation) ----
    label_oh = (col == label)                                             # (N, C) bool
    label_oh_f = label_oh.astype(jnp.float32)

    # ---- pred = argmax(logit, dim=1), one-hot (first-max tie break) ----
    row_max = jnp.max(logit, axis=1, keepdims=True)                       # (N, 1)
    is_max = logit >= row_max
    pred_idx = jnp.min(jnp.where(is_max, col, C), axis=1, keepdims=True)  # (N, 1)
    pred_oh = (col == pred_idx)                                           # (N, C) bool

    # ---- softmax threshold mask without the divide ----
    # prob > t  <=>  exp(logit - max) > t * sum(exp(logit - max))   (sum > 0)
    e = jnp.exp(logit - row_max)
    sum_e = jnp.sum(e, axis=1, keepdims=True)
    thresh = e > (pred_threshold * sum_e)                                 # (N, C) bool

    # ---- f = lin(z) = z @ W^T + b  (contract over K; no transpose materialized) ----
    f = jax.lax.dot_general(z, w, (((1,), (1,)), ((), ())),
                            preferred_element_type=jnp.float32) + b       # (N, D)

    # ---- tp_mask = pred_onehot & label_onehot & (prob > threshold) ----
    tp = (pred_oh & label_oh & thresh).astype(jnp.float32)                # (N, C)

    # ---- fetch_memory ----
    mask_sum = jnp.sum(tp, axis=0, keepdims=True)                         # (1, C)
    mask_sum = jnp.where(mask_sum == 0.0, 1.0, mask_sum)
    inv_mask_sum = pl.reciprocal(mask_sum, approx=True)
    # f.T @ tp_mask via dot_general (contract over the batch dim) -> (D, C)
    f_mask = jax.lax.dot_general(f, tp, (((0,), (0,)), ((), ())),
                                 preferred_element_type=jnp.float32)
    f_mask = f_mask * inv_mask_sum
    mem = momentum * hist_mem + (1.0 - momentum) * f_mask                 # (D, C)
    new_mem_ref[...] = mem

    # ---- calculate_similarity (x / (norm + 1e-12); divides -> EUP reciprocals) ----
    f_norm = jnp.sqrt(jnp.sum(f * f, axis=1, keepdims=True))
    f_n = f * pl.reciprocal(f_norm + 1e-12, approx=True)                  # row-normalized
    mem_norm = jnp.sqrt(jnp.sum(mem * mem, axis=0, keepdims=True))
    mem_n = mem * pl.reciprocal(mem_norm + 1e-12, approx=True)            # col-normalized
    sim = jnp.dot(f_n, mem_n, preferred_element_type=jnp.float32) * inv_temperature  # (N, C)

    # ---- cross entropy (mean reduction) with integer labels ----
    sim_max = jnp.max(sim, axis=1, keepdims=True)
    lse = jnp.log(jnp.sum(jnp.exp(sim - sim_max), axis=1, keepdims=True)) + sim_max   # (N, 1)
    nll = lse - jnp.sum(sim * label_oh_f, axis=1, keepdims=True)                      # (N, 1)
    loss_ref[0, 0] = jnp.sum(nll) * inv_n                                 # scalar -> SMEM


def _f32(x):
    return x if x.dtype == jnp.float32 else x.astype(jnp.float32)


def contrastive_loss(logit, z, label, lin_weight, lin_bias, hist_mem, *,
                     momentum=0.9, temperature=0.125, pred_threshold=0.0):
    """logit (N,C), z (N,K), label (N,) int, lin_weight (D,K), lin_bias (D,), hist_mem (D,C).

    Returns (loss scalar, new_mem (D,C)); new_mem aliases the hist_mem HBM buffer,
    mirroring the PyTorch in-place `self.hist_mem = mem.detach()` buffer update.
    """
    N, C = logit.shape
    D, K = lin_weight.shape

    label2d = label.astype(jnp.int32).reshape(N, 1)
    b2 = _f32(lin_bias).reshape(1, D)

    kernel = functools.partial(
        contrastive_loss_kernel,
        momentum=float(momentum),
        inv_temperature=1.0 / float(temperature),
        pred_threshold=float(pred_threshold),
        inv_n=1.0 / float(N),
    )
    vmem = pl.BlockSpec(memory_space=pltpu.MemorySpace.VMEM)
    smem = pl.BlockSpec(memory_space=pltpu.MemorySpace.SMEM)
    loss, new_mem = pl.pallas_call(
        kernel,
        out_shape=(jax.ShapeDtypeStruct((1, 1), jnp.float32),
                   jax.ShapeDtypeStruct((D, C), jnp.float32)),
        in_specs=[vmem] * 6,
        out_specs=(smem, vmem),
        # hist_mem (input 5) is updated in place -> new_mem (output 1): matches the
        # PyTorch in-place buffer update and avoids a second (D,C) HBM allocation.
        input_output_aliases={5: 1},
    )(label2d, _f32(logit), _f32(z), _f32(lin_weight), b2, _f32(hist_mem))
    # TODO(synk): the PyTorch module mutates self.hist_mem only in training mode; here the
    # updated memory is always returned as the aliased `new_mem` output (caller decides).
    return loss[0, 0], new_mem


if __name__ == "__main__":
    key = jax.random.PRNGKey(0)
    # small shapes consistent with the forward: batch=8, n_class=8, n_channel=32, d=32
    N, C, K, D = 8, 8, 32, 32
    k1, k2, k3, k4, k5, k6 = jax.random.split(key, 6)

    logit = jax.random.normal(k1, (N, C), jnp.float32)
    z = jax.random.normal(k2, (N, K), jnp.float32)
    label = jax.random.randint(k3, (N,), 0, C, dtype=jnp.int32)

    # deterministic parameter / buffer init (same shapes as the nn.Module __init__)
    lin_weight = jax.random.normal(k4, (D, K), jnp.float32) * (1.0 / jnp.sqrt(K))
    lin_bias = jax.random.normal(k5, (D,), jnp.float32) * 0.01
    hist_mem = jax.random.normal(k6, (D, C), jnp.float32)

    loss, new_mem = contrastive_loss(logit, z, label, lin_weight, lin_bias, hist_mem,
                                     momentum=0.9, temperature=0.125, pred_threshold=0.0)
    jax.block_until_ready((loss, new_mem))
    print("KERNEL_OK")
</pallas_src>

<mosaic_0001>
module attributes {stable_mosaic.version = 11 : i64} {
  func.func @contrastive_loss_kernel(%arg0: memref<8x1xi32, #tpu.memory_space<vmem>>, %arg1: memref<8x8xf32, #tpu.memory_space<vmem>>, %arg2: memref<8x32xf32, #tpu.memory_space<vmem>>, %arg3: memref<32x32xf32, #tpu.memory_space<vmem>>, %arg4: memref<1x32xf32, #tpu.memory_space<vmem>>, %arg5: memref<32x8xf32, #tpu.memory_space<vmem>>, %arg6: memref<1x1xf32, #tpu.memory_space<smem>>, %arg7: memref<32x8xf32, #tpu.memory_space<vmem>>) attributes {dimension_semantics = [], scalar_prefetch = 0 : i64, scratch_operands = 0 : i64, tpu.core_type = #tpu.core_type<tc>} {
    %c0 = arith.constant 0 : index
    %c0_0 = arith.constant 0 : index
    %0 = vector.load %arg0[%c0, %c0_0] : memref<8x1xi32, #tpu.memory_space<vmem>>, vector<8x1xi32>
    %c0_1 = arith.constant 0 : index
    %c0_2 = arith.constant 0 : index
    %1 = vector.load %arg1[%c0_1, %c0_2] : memref<8x8xf32, #tpu.memory_space<vmem>>, vector<8x8xf32>
    %c0_3 = arith.constant 0 : index
    %c0_4 = arith.constant 0 : index
    %2 = vector.load %arg2[%c0_3, %c0_4] : memref<8x32xf32, #tpu.memory_space<vmem>>, vector<8x32xf32>
    %c0_5 = arith.constant 0 : index
    %c0_6 = arith.constant 0 : index
    %3 = vector.load %arg3[%c0_5, %c0_6] : memref<32x32xf32, #tpu.memory_space<vmem>>, vector<32x32xf32>
    %c0_7 = arith.constant 0 : index
    %c0_8 = arith.constant 0 : index
    %4 = vector.load %arg4[%c0_7, %c0_8] : memref<1x32xf32, #tpu.memory_space<vmem>>, vector<1x32xf32>
    %c0_9 = arith.constant 0 : index
    %c0_10 = arith.constant 0 : index
    %5 = vector.load %arg5[%c0_9, %c0_10] : memref<32x8xf32, #tpu.memory_space<vmem>>, vector<32x8xf32>
    %6 = tpu.iota {dimensions = array<i32: 1>} : vector<8x8xi32>
    %7 = vector.broadcast %0 : vector<8x1xi32> to vector<8x8xi32>
    %8 = arith.cmpi eq, %6, %7 : vector<8x8xi32>
    %9 = arith.extui %8 : vector<8x8xi1> to vector<8x8xi32>
    %10 = arith.sitofp %9 : vector<8x8xi32> to vector<8x8xf32>
    %cst = arith.constant dense<0xFF800000> : vector<8xf32>
    %11 = vector.multi_reduction <maximumf>, %1, %cst [1] : vector<8x8xf32> to vector<8xf32>
    %12 = vector.shape_cast %11 : vector<8xf32> to vector<8x1xf32>
    %13 = vector.broadcast %12 : vector<8x1xf32> to vector<8x8xf32>
    %14 = arith.cmpf oge, %1, %13 : vector<8x8xf32>
    %c8_i32 = arith.constant 8 : i32
    %15 = vector.broadcast %c8_i32 : i32 to vector<8x8xi32>
    %16 = arith.select %14, %6, %15 : vector<8x8xi1>, vector<8x8xi32>
    %cst_11 = arith.constant dense<2147483647> : vector<8xi32>
    %17 = vector.multi_reduction <minsi>, %16, %cst_11 [1] : vector<8x8xi32> to vector<8xi32>
    %18 = vector.shape_cast %17 : vector<8xi32> to vector<8x1xi32>
    %19 = vector.broadcast %18 : vector<8x1xi32> to vector<8x8xi32>
    %20 = arith.cmpi eq, %6, %19 : vector<8x8xi32>
    %21 = vector.broadcast %12 : vector<8x1xf32> to vector<8x8xf32>
    %22 = arith.subf %1, %21 : vector<8x8xf32>
    %23 = math.exp %22 : vector<8x8xf32>
    %cst_12 = arith.constant dense<0.000000e+00> : vector<8xf32>
    %24 = vector.multi_reduction <add>, %23, %cst_12 [1] : vector<8x8xf32> to vector<8xf32>
    %25 = vector.shape_cast %24 : vector<8xf32> to vector<8x1xf32>
    %cst_13 = arith.constant 0.000000e+00 : f32
    %26 = vector.broadcast %cst_13 : f32 to vector<8x1xf32>
    %27 = arith.mulf %26, %25 : vector<8x1xf32>
    %28 = vector.broadcast %27 : vector<8x1xf32> to vector<8x8xf32>
    %29 = arith.cmpf ogt, %23, %28 : vector<8x8xf32>
    %cst_14 = arith.constant dense<0.000000e+00> : vector<8x32xf32>
    %30 = tpu.matmul %2, %3, %cst_14 {dimension_numbers = #tpu.dot_dimension_numbers<[1], [1], [0], [0], [0, 0, 1, 0], [], []>} : vector<8x32xf32>, vector<32x32xf32>, vector<8x32xf32> -> vector<8x32xf32>
    %31 = vector.broadcast %4 : vector<1x32xf32> to vector<8x32xf32>
    %32 = arith.addf %30, %31 : vector<8x32xf32>
    %33 = arith.andi %20, %8 : vector<8x8xi1>
    %34 = arith.andi %33, %29 : vector<8x8xi1>
    %35 = arith.extui %34 : vector<8x8xi1> to vector<8x8xi32>
    %36 = arith.sitofp %35 : vector<8x8xi32> to vector<8x8xf32>
    %cst_15 = arith.constant dense<0.000000e+00> : vector<8xf32>
    %37 = vector.multi_reduction <add>, %36, %cst_15 [0] : vector<8x8xf32> to vector<8xf32>
    %38 = vector.shape_cast %37 : vector<8xf32> to vector<1x8xf32>
    %cst_16 = arith.constant 0.000000e+00 : f32
    %39 = vector.broadcast %cst_16 : f32 to vector<1x8xf32>
    %40 = arith.cmpf oeq, %38, %39 : vector<1x8xf32>
    %cst_17 = arith.constant 1.000000e+00 : f32
    %41 = vector.broadcast %cst_17 : f32 to vector<1x8xf32>
    %42 = arith.select %40, %41, %38 : vector<1x8xi1>, vector<1x8xf32>
    %43 = tpu.reciprocal %42 {approx = true} : vector<1x8xf32> -> vector<1x8xf32>
    %cst_18 = arith.constant dense<0.000000e+00> : vector<32x8xf32>
    %44 = tpu.matmul %32, %36, %cst_18 {dimension_numbers = #tpu.dot_dimension_numbers<[0], [0], [1], [1], [0, 1, 1, 1], [], []>} : vector<8x32xf32>, vector<8x8xf32>, vector<32x8xf32> -> vector<32x8xf32>
    %45 = vector.broadcast %43 : vector<1x8xf32> to vector<32x8xf32>
    %46 = arith.mulf %44, %45 : vector<32x8xf32>
    %cst_19 = arith.constant 0.899999976 : f32
    %47 = vector.broadcast %cst_19 : f32 to vector<32x8xf32>
    %48 = arith.mulf %47, %5 : vector<32x8xf32>
    %cst_20 = arith.constant 1.000000e-01 : f32
    %49 = vector.broadcast %cst_20 : f32 to vector<32x8xf32>
    %50 = arith.mulf %49, %46 : vector<32x8xf32>
    %51 = arith.addf %48, %50 : vector<32x8xf32>
    %c0_21 = arith.constant 0 : index
    %c0_22 = arith.constant 0 : index
    %52 = vector.load %arg7[%c0_21, %c0_22] : memref<32x8xf32, #tpu.memory_space<vmem>>, vector<32x8xf32>
    tpu.vector_store %arg7[%c0_21, %c0_22], %51 {strides = array<i32>} : memref<32x8xf32, #tpu.memory_space<vmem>>, vector<32x8xf32>,
    %53 = arith.mulf %32, %32 : vector<8x32xf32>
    %cst_23 = arith.constant dense<0.000000e+00> : vector<8xf32>
    %54 = vector.multi_reduction <add>, %53, %cst_23 [1] : vector<8x32xf32> to vector<8xf32>
    %55 = vector.shape_cast %54 : vector<8xf32> to vector<8x1xf32>
    %56 = math.sqrt %55 : vector<8x1xf32>
    %cst_24 = arith.constant 9.99999996E-13 : f32
    %57 = vector.broadcast %cst_24 : f32 to vector<8x1xf32>
    %58 = arith.addf %56, %57 : vector<8x1xf32>
    %59 = tpu.reciprocal %58 {approx = true} : vector<8x1xf32> -> vector<8x1xf32>
    %60 = vector.broadcast %59 : vector<8x1xf32> to vector<8x32xf32>
    %61 = arith.mulf %32, %60 : vector<8x32xf32>
    %62 = arith.mulf %51, %51 : vector<32x8xf32>
    %cst_25 = arith.constant dense<0.000000e+00> : vector<8xf32>
    %63 = vector.multi_reduction <add>, %62, %cst_25 [0] : vector<32x8xf32> to vector<8xf32>
    %64 = vector.shape_cast %63 : vector<8xf32> to vector<1x8xf32>
    %65 = math.sqrt %64 : vector<1x8xf32>
    %cst_26 = arith.constant 9.99999996E-13 : f32
    %66 = vector.broadcast %cst_26 : f32 to vector<1x8xf32>
    %67 = arith.addf %65, %66 : vector<1x8xf32>
    %68 = tpu.reciprocal %67 {approx = true} : vector<1x8xf32> -> vector<1x8xf32>
    %69 = vector.broadcast %68 : vector<1x8xf32> to vector<32x8xf32>
    %70 = arith.mulf %51, %69 : vector<32x8xf32>
    %cst_27 = arith.constant dense<0.000000e+00> : vector<8x8xf32>
    %71 = tpu.matmul %61, %70, %cst_27 {dimension_numbers = #tpu.dot_dimension_numbers<[1], [0], [0], [1], [0, 0, 1, 1], [], []>} : vector<8x32xf32>, vector<32x8xf32>, vector<8x8xf32> -> vector<8x8xf32>
    %cst_28 = arith.constant 8.000000e+00 : f32
    %72 = vector.broadcast %cst_28 : f32 to vector<8x8xf32>
    %73 = arith.mulf %71, %72 : vector<8x8xf32>
    %cst_29 = arith.constant dense<0xFF800000> : vector<8xf32>
    %74 = vector.multi_reduction <maximumf>, %73, %cst_29 [1] : vector<8x8xf32> to vector<8xf32>
    %75 = vector.shape_cast %74 : vector<8xf32> to vector<8x1xf32>
    %76 = vector.broadcast %75 : vector<8x1xf32> to vector<8x8xf32>
    %77 = arith.subf %73, %76 : vector<8x8xf32>
    %78 = math.exp %77 : vector<8x8xf32>
    %cst_30 = arith.constant dense<0.000000e+00> : vector<8xf32>
    %79 = vector.multi_reduction <add>, %78, %cst_30 [1] : vector<8x8xf32> to vector<8xf32>
    %80 = vector.shape_cast %79 : vector<8xf32> to vector<8x1xf32>
    %81 = math.log %80 : vector<8x1xf32>
    %82 = arith.addf %81, %75 : vector<8x1xf32>
    %83 = arith.mulf %73, %10 : vector<8x8xf32>
    %cst_31 = arith.constant dense<0.000000e+00> : vector<8xf32>
    %84 = vector.multi_reduction <add>, %83, %cst_31 [1] : vector<8x8xf32> to vector<8xf32>
    %85 = vector.shape_cast %84 : vector<8xf32> to vector<8x1xf32>
    %86 = arith.subf %82, %85 : vector<8x1xf32>
    %87 = vector.shape_cast %86 : vector<8x1xf32> to vector<1x8x1xf32>
    %cst_32 = arith.constant dense<0.000000e+00> : vector<1xf32>
    %88 = vector.multi_reduction <add>, %87, %cst_32 [1, 2] : vector<1x8x1xf32> to vector<1xf32>
    %89 = vector.shape_cast %88 : vector<1xf32> to vector<1x1x1xf32>
    %90 = vector.extract %89[0, 0, 0] : f32 from vector<1x1x1xf32>
    %cst_33 = arith.constant 1.250000e-01 : f32
    %91 = arith.mulf %90, %cst_33 : f32
    %c0_34 = arith.constant 0 : index
    %c0_35 = arith.constant 0 : index
    %92 = memref.load %arg6[%c0_34, %c0_35] : memref<1x1xf32, #tpu.memory_space<smem>>
    memref.store %91, %arg6[%c0_34, %c0_35] : memref<1x1xf32, #tpu.memory_space<smem>>
    return
  }
}

</mosaic_0001>

<llo_original>
// kernel: tpu_custom_call.1
$region0: #{tpu_custom_call.1}
  #allocation0 [shape = 'u32[]', space=smem, size = 0x4, offset = 0x4, fixed_abs, tag = 'smem constant byte address 0x4 - core index']
  #allocation1 [shape = 'u32[144,128]{1,0:T(1,128)}', space=vmem, size = 0x12000, scoped, tag = 'internal scratch']
  %s0 = inlined_call_operand.vmem [shape: s32[8,1], index: 0, kind: input, shape index: {}]
  %s1 = inlined_call_operand.vmem [shape: f32[8,8], index: 1, kind: input, shape index: {}]
  %s2 = inlined_call_operand.vmem [shape: f32[8,32], index: 2, kind: input, shape index: {}]
  %s3 = inlined_call_operand.vmem [shape: f32[32,32], index: 3, kind: input, shape index: {}]
  %s4 = inlined_call_operand.vmem [shape: f32[1,32], index: 4, kind: input, shape index: {}]
  %s5 = inlined_call_operand.vmem [shape: f32[32,8], index: 5, kind: input, shape index: {}, may-alias: {5,7}]
  %s6 = inlined_call_operand.hbm [shape: f32[1,1], index: 6, kind: output, shape index: {0}]
  %s7 = inlined_call_operand.vmem [shape: f32[32,8], index: 7, kind: output, shape index: {1}, may-alias: {5,7}]
  %8 = xla_tuple %s6, %s7
  %s9 = sld [smem:[#allocation0]]
  $region42: #{tpu_custom_call.1} parent=0
    _
  %s11 = ssub.s32 1, %s9
  %s12 = scalar_select 0, %s11, %s9
  $region1: #{tpu_custom_call.1} parent=0
    #allocation2 [shape = 'u8[512]{0}', space=smem, size = 0x200, scoped, tag = 'output window, operand 0, single buffered']
    #allocation3 [shape = 's32[1]{0}', space=sflag, size = 0x4, scoped, tag = 'scoped memory for tpu_custom_call.1']
    %13 = vsyncpa [#allocation3], 0
    // Predicated region
    $region2: #{tpu_custom_call.1} parent=1 // pred_check
      _
    $region3: #{tpu_custom_call.1} parent=1 // pred_check_branch
      %15 = sbr.rel (0) target = $region5
    $region4: #{tpu_custom_call.1} parent=1 // pred_region
      _
    $region5: #{tpu_custom_call.1} parent=1 // pred_fallthru
      _
    // Predicated region
    $region6: #{tpu_custom_call.1} parent=1 // pred_check
      _
    $region7: #{tpu_custom_call.1} parent=1 // pred_check_branch
      %17 = sbr.rel (0) target = $region9
    $region8: #{tpu_custom_call.1} parent=1 // pred_region
      _
    $region9: #{tpu_custom_call.1} parent=1 // pred_fallthru
      _
    // Predicated region
    $region10: #{tpu_custom_call.1} parent=1 // pred_check
      _
    $region11: #{tpu_custom_call.1} parent=1 // pred_check_branch
      %19 = sbr.rel (0) target = $region13
    $region12: #{tpu_custom_call.1} parent=1 // pred_region
      _
    $region13: #{tpu_custom_call.1} parent=1 // pred_fallthru
      _
    // Predicated region
    $region14: #{tpu_custom_call.1} parent=1 // pred_check
      _
    $region15: #{tpu_custom_call.1} parent=1 // pred_check_branch
      %21 = sbr.rel (0) target = $region17
    $region16: #{tpu_custom_call.1} parent=1 // pred_region
      _
    $region17: #{tpu_custom_call.1} parent=1 // pred_fallthru
      _
    // Predicated region
    $region18: #{tpu_custom_call.1} parent=1 // pred_check
      _
    $region19: #{tpu_custom_call.1} parent=1 // pred_check_branch
      %23 = sbr.rel (0) target = $region21
    $region20: #{tpu_custom_call.1} parent=1 // pred_region
      _
    $region21: #{tpu_custom_call.1} parent=1 // pred_fallthru
      _
    // Predicated region
    $region22: #{tpu_custom_call.1} parent=1 // pred_check
      _
    $region23: #{tpu_custom_call.1} parent=1 // pred_check_branch
      %25 = sbr.rel (0) target = $region25
    $region24: #{tpu_custom_call.1} parent=1 // pred_region
      _
    $region25: #{tpu_custom_call.1} parent=1 // pred_fallthru
      _
    %v26 = vld [vmem:[%s0] sm:$0xff]
    %v27 = vld [vmem:[%s1] sm:$0xff]
    %v28 = vld [vmem:[%s2] sm:$0xff]
    %v29 = vld [vmem:[%s3] sm:$0xff]
    %v30 = vld [vmem:[%s3 + $0x8] sm:$0xff]
    %v31 = vld [vmem:[%s3 + $0x10] sm:$0xff]
    %v32 = vld [vmem:[%s3 + $0x18] sm:$0xff]
    %v33 = vld [vmem:[%s4] sm:$0x1]
    %v34 = vld [vmem:[%s5] sm:$0xff]
    %v35 = vld [vmem:[%s5 + $0x8] sm:$0xff]
    %v36 = vld [vmem:[%s5 + $0x10] sm:$0xff]
    %v37 = vld [vmem:[%s5 + $0x18] sm:$0xff]
    %v38 = vlaneseq
    %v39 = vand.u32 %v38, 127
    %40 = vset.pattern.permute.xlu0 0
    %41 = vperm.xlu0 %40, %v26
    %v42 = vpop.permute.xlu0 %41
    %vm43 = vcmp.eq.s32.totalorder %v39, %v42
    %v44 = vsel %vm43, 1, 0
    %v45 = vcvt.s32.f32 %v44
    %vm46 = vcmask 64512
    %v47 = vsel %vm46, %v27, -inf
    %48 = vmax.xlane.f32.xlu0 %v47
    %v49 = vpop.xlane.xlu0 %48
    %vm50 = vcmp.ge.f32.partialorder %v27, %v49
    %v51 = vsel %vm50, %v39, 8
    %v52 = vsel %vm46, %v51, 2147483647
    %v53 = vand.u32 %v52, 65535
    %v54 = vshra.s32 %v52, 16
    %v55 = vcvt.s32.f32 %v53
    %v56 = vcvt.s32.f32 %v54
    %57 = vmin.xlane.f32.xlu0 %v56
    %v58 = vpop.xlane.xlu0 %57
    %vm59 = vcmp.eq.f32.partialorder %v56, %v58
    %v60 = vsel %vm59, %v55, inf
    %61 = vmin.xlane.f32.xlu0 %v60
    %v62 = vpop.xlane.xlu0 %61
    %v63 = vcvt.f32.s32 %v62
    %v64 = vcvt.f32.s32 %v58
    %v65 = vshll.u32 %v64, 16
    %v66 = vadd.s32 %v65, %v63
    %vm67 = vcmp.eq.s32.totalorder %v39, %v66
    %v68 = vsub.f32 %v27, %v49
    %v69 = vmul.f32 %v68, 1.442695
    %v70 = vpow.pop %v69
    %v71 = vsel %vm46, %v70, 0.0
    %72 = vadd.xlane.f32.xlu0 %v71
    %v73 = vpop.xlane.xlu0 %72
    %v74 = vmul.f32 %v73, 0.0
    %vm75 = vcmp.gt.f32.partialorder %v70, %v74
    %v77 = vlaneseq
    %v78 = vshrl.u32 %v77, 7
    %v79 = vsub.s32 0, %v78
    %v80 = vrot.slane %v33, %v79
    %vm82 = vcmask 261120
    %v84 = vsel %vm82, %v28, 0
    %v87 = vsel %vm82, %v29, 0
    %v90 = vsel %vm82, %v30, 0
    %v93 = vsel %vm82, %v31, 0
    %v96 = vsel %vm82, %v32, 0
    %98 = vmatprep.subr.mxu0 0.0
    %99 = vmatpush1.xpose.msra.mxu0 %v87
    %100 = vmatprep.subr.mxu0 0.0
    %101 = vmatpush1.xpose.msra.mxu0 %v90
    %102 = vmatprep.subr.mxu0 0.0
    %103 = vmatpush1.xpose.msra.mxu0 %v93
    %104 = vmatprep.subr.mxu0 0.0
    %105 = vmatpush1.xpose.msra.mxu0 %v96
    %106 = vmatprep.subr.mxu0 0.0
    %107 = vmatpush1.xpose.msra.mxu0 0.0
    %108 = vmatprep.subr.mxu0 0.0
    %109 = vmatpush1.xpose.msra.mxu0 0.0
    %110 = vmatprep.subr.mxu0 0.0
    %111 = vmatpush1.xpose.msra.mxu0 0.0
    %112 = vmatprep.subr.mxu0 0.0
    %113 = vmatpush1.xpose.msra.mxu0 0.0
    %114 = vmatprep.subr.mxu0 0.0
    %115 = vmatpush1.xpose.msra.mxu0 0.0
    %116 = vmatprep.subr.mxu0 0.0
    %117 = vmatpush1.xpose.msra.mxu0 0.0
    %118 = vmatprep.subr.mxu0 0.0
    %119 = vmatpush1.xpose.msra.mxu0 0.0
    %120 = vmatprep.subr.mxu0 0.0
    %121 = vmatpush1.xpose.msra.mxu0 0.0
    %122 = vmatprep.subr.mxu0 0.0
    %123 = vmatpush1.xpose.msra.mxu0 0.0
    %124 = vmatprep.subr.mxu0 0.0
    %125 = vmatpush1.xpose.msra.mxu0 0.0
    %126 = vmatprep.subr.mxu0 0.0
    %127 = vmatpush1.xpose.msra.mxu0 0.0
    %128 = vmatprep.subr.mxu0 0.0
    %129 = vmatpush1.xpose.msra.mxu0 0.0
    %130 = vmatprep.subr.mxu0 0.0
    %131 = vmatpush1.xpose.msra.mxu0 0.0
    %132 = vmatprep.subr.mxu0 0.0
    %133 = vmatpush1.xpose.msra.mxu0 0.0
    %134 = vmatprep.subr.mxu0 0.0
    %135 = vmatpush1.xpose.msra.mxu0 0.0
    %136 = vmatprep.subr.mxu0 0.0
    %137 = vmatpush1.xpose.msra.mxu0 0.0
    %138 = vmatprep.subr.mxu0 0.0
    %139 = vmatpush1.xpose.msra.mxu0 0.0
    %140 = vmatprep.subr.mxu0 0.0
    %141 = vmatpush1.xpose.msra.mxu0 0.0
    %142 = vmatprep.subr.mxu0 0.0
    %143 = vmatpush1.xpose.msra.mxu0 0.0
    %144 = vmatprep.subr.mxu0 0.0
    %145 = vmatpush1.xpose.msra.mxu0 0.0
    %146 = vmatprep.subr.mxu0 0.0
    %147 = vmatpush1.xpose.msra.mxu0 0.0
    %148 = vmatprep.subr.mxu0 0.0
    %149 = vmatpush1.xpose.msra.mxu0 0.0
    %150 = vmatprep.subr.mxu0 0.0
    %151 = vmatpush1.xpose.msra.mxu0 0.0
    %152 = vmatprep.subr.mxu0 0.0
    %153 = vmatpush1.xpose.msra.mxu0 0.0
    %154 = vmatprep.subr.mxu0 0.0
    %155 = vmatpush1.xpose.msra.mxu0 0.0
    %156 = vmatprep.subr.mxu0 0.0
    %157 = vmatpush1.xpose.msra.mxu0 0.0
    %158 = vmatprep.subr.mxu0 0.0
    %159 = vmatpush1.xpose.msra.mxu0 0.0
    %160 = vmatprep.subr.mxu0 0.0
    %161 = vmatpush1.xpose.msra.mxu0 0.0
    %162 = vmatprep.mubr.f32.mxu0 0.0
    %163 = vmatmul.mubr.f32.gmra.mrb[0].mxu0 %v84
    %v164 = vpop.f32.mrb[0].mxu0
    %v165 = vadd.f32 %v80, %v164
    %v166 = vpop.f32.mrb[0].mxu0
    %167 = vdwg.mxu0
    %vm168 = vmand %vm67, %vm43
    %vm169 = vmand %vm168, %vm75
    %v170 = vsel %vm169, 1, 0
    %v171 = vcvt.s32.f32 %v170
    %v172 = vsel %vm46, %v171, 0.0
    %v173 = vrot.slane %v172, 4
    %v174 = vadd.f32 %v172, %v173
    %v175 = vrot.slane %v174, 2
    %v176 = vadd.f32 %v174, %v175
    %v177 = vrot.slane %v176, 1
    %v178 = vadd.f32 %v176, %v177
    %vm179 = vcmp.eq.f32.partialorder %v178, 0.0
    %v180 = vsel %vm179, 1.0, %v178
    %v181 = vrcp.pop %v180
    %182 = vxpose.xlu0.b32.start [1/16] %v165, 128
    %183 = vxpose.xlu0.b32.cont [2/16] 0.0, 128
    %184 = vxpose.xlu0.b32.cont [3/16] 0.0, 128
    %185 = vxpose.xlu0.b32.cont [4/16] 0.0, 128
    %186 = vxpose.xlu0.b32.cont [5/16] 0.0, 128
    %187 = vxpose.xlu0.b32.cont [6/16] 0.0, 128
    %188 = vxpose.xlu0.b32.cont [7/16] 0.0, 128
    %189 = vxpose.xlu0.b32.cont [8/16] 0.0, 128
    %190 = vxpose.xlu0.b32.cont [9/16] 0.0, 128
    %191 = vxpose.xlu0.b32.cont [10/16] 0.0, 128
    %192 = vxpose.xlu0.b32.cont [11/16] 0.0, 128
    %193 = vxpose.xlu0.b32.cont [12/16] 0.0, 128
    %194 = vxpose.xlu0.b32.cont [13/16] 0.0, 128
    %195 = vxpose.xlu0.b32.cont [14/16] 0.0, 128
    %196 = vxpose.xlu0.b32.cont [15/16] 0.0, 128
    %197 = vxpose.xlu0.b32.end [16/16] 0.0, 128
    %v198 = vpop.trf.xlu0
    %v199 = vpop.trf.xlu0
    %v200 = vpop.trf.xlu0
    %v201 = vpop.trf.xlu0
    %v202 = vpop.trf.xlu0
    %v203 = vpop.trf.xlu0
    %v204 = vpop.trf.xlu0
    %v205 = vpop.trf.xlu0
    %v206 = vpop.trf.xlu0
    %v207 = vpop.trf.xlu0
    %v208 = vpop.trf.xlu0
    %v209 = vpop.trf.xlu0
    %v210 = vpop.trf.xlu0
    %v211 = vpop.trf.xlu0
    %v212 = vpop.trf.xlu0
    %v213 = vpop.trf.xlu0
    %v215 = vsel %vm46, %v198, 0
    %v218 = vsel %vm46, %v199, 0
    %v221 = vsel %vm46, %v200, 0
    %v224 = vsel %vm46, %v201, 0
    %226 = vmatprep.subr.mxu0 0.0
    %227 = vmatpush1.msra.mxu0 %v171
    %228 = vmatprep.subr.mxu0 0.0
    %229 = vmatpush1.msra.mxu0 0.0
    %230 = vmatprep.subr.mxu0 0.0
    %231 = vmatpush1.msra.mxu0 0.0
    %232 = vmatprep.subr.mxu0 0.0
    %233 = vmatpush1.msra.mxu0 0.0
    %234 = vmatprep.subr.mxu0 0.0
    %235 = vmatpush1.msra.mxu0 0.0
    %236 = vmatprep.subr.mxu0 0.0
    %237 = vmatpush1.msra.mxu0 0.0
    %238 = vmatprep.subr.mxu0 0.0
    %239 = vmatpush1.msra.mxu0 0.0
    %240 = vmatprep.subr.mxu0 0.0
    %241 = vmatpush1.msra.mxu0 0.0
    %242 = vmatprep.subr.mxu0 0.0
    %243 = vmatpush1.msra.mxu0 0.0
    %244 = vmatprep.subr.mxu0 0.0
    %245 = vmatpush1.msra.mxu0 0.0
    %246 = vmatprep.subr.mxu0 0.0
    %247 = vmatpush1.msra.mxu0 0.0
    %248 = vmatprep.subr.mxu0 0.0
    %249 = vmatpush1.msra.mxu0 0.0
    %250 = vmatprep.subr.mxu0 0.0
    %251 = vmatpush1.msra.mxu0 0.0
    %252 = vmatprep.subr.mxu0 0.0
    %253 = vmatpush1.msra.mxu0 0.0
    %254 = vmatprep.subr.mxu0 0.0
    %255 = vmatpush1.msra.mxu0 0.0
    %256 = vmatprep.subr.mxu0 0.0
    %257 = vmatpush1.msra.mxu0 0.0
    %258 = vmatprep.subr.mxu0 0.0
    %259 = vmatpush1.msra.mxu0 0.0
    %260 = vmatprep.subr.mxu0 0.0
    %261 = vmatpush1.msra.mxu0 0.0
    %262 = vmatprep.subr.mxu0 0.0
    %263 = vmatpush1.msra.mxu0 0.0
    %264 = vmatprep.subr.mxu0 0.0
    %265 = vmatpush1.msra.mxu0 0.0
    %266 = vmatprep.subr.mxu0 0.0
    %267 = vmatpush1.msra.mxu0 0.0
    %268 = vmatprep.subr.mxu0 0.0
    %269 = vmatpush1.msra.mxu0 0.0
    %270 = vmatprep.subr.mxu0 0.0
    %271 = vmatpush1.msra.mxu0 0.0
    %272 = vmatprep.subr.mxu0 0.0
    %273 = vmatpush1.msra.mxu0 0.0
    %274 = vmatprep.subr.mxu0 0.0
    %275 = vmatpush1.msra.mxu0 0.0
    %276 = vmatprep.subr.mxu0 0.0
    %277 = vmatpush1.msra.mxu0 0.0
    %278 = vmatprep.subr.mxu0 0.0
    %279 = vmatpush1.msra.mxu0 0.0
    %280 = vmatprep.subr.mxu0 0.0
    %281 = vmatpush1.msra.mxu0 0.0
    %282 = vmatprep.subr.mxu0 0.0
    %283 = vmatpush1.msra.mxu0 0.0
    %284 = vmatprep.subr.mxu0 0.0
    %285 = vmatpush1.msra.mxu0 0.0
    %286 = vmatprep.subr.mxu0 0.0
    %287 = vmatpush1.msra.mxu0 0.0
    %288 = vmatprep.subr.mxu0 0.0
    %289 = vmatpush1.msra.mxu0 0.0
    %290 = vmatprep.mubr.f32.mxu0 0.0
    %291 = vmatmul.mubr.f32.gmra.mrb[0].mxu0 %v215
    %v292 = vpop.f32.mrb[0].mxu0
    %v293 = vadd.f32 0.0, %v292
    %v294 = vpop.f32.mrb[0].mxu0
    %295 = vmatprep.mubr.f32.mxu0 0.0
    %296 = vmatmul.mubr.f32.gmra.mrb[0].mxu0 %v218
    %v297 = vpop.f32.mrb[0].mxu0
    %v298 = vadd.f32 0.0, %v297
    %v299 = vpop.f32.mrb[0].mxu0
    %300 = vmatprep.mubr.f32.mxu0 0.0
    %301 = vmatmul.mubr.f32.gmra.mrb[0].mxu0 %v221
    %v302 = vpop.f32.mrb[0].mxu0
    %v303 = vadd.f32 0.0, %v302
    %v304 = vpop.f32.mrb[0].mxu0
    %305 = vmatprep.mubr.f32.mxu0 0.0
    %306 = vmatmul.mubr.f32.gmra.mrb[0].mxu0 %v224
    %v307 = vpop.f32.mrb[0].mxu0
    %v308 = vadd.f32 0.0, %v307
    %v309 = vpop.f32.mrb[0].mxu0
    %310 = vdwg.mxu0
    %v311 = vmul.f32 %v293, %v181
    %v312 = vmul.f32 %v298, %v181
    %v313 = vmul.f32 %v303, %v181
    %v314 = vmul.f32 %v308, %v181
    %v315 = vmul.f32 %v34, 0.9
    %v316 = vmul.f32 %v35, 0.9
    %v317 = vmul.f32 %v36, 0.9
    %v318 = vmul.f32 %v37, 0.9
    %v319 = vmul.f32 %v311, 0.1
    %v320 = vmul.f32 %v312, 0.1
    %v321 = vmul.f32 %v313, 0.1
    %v322 = vmul.f32 %v314, 0.1
    %v323 = vadd.f32 %v315, %v319
    %v324 = vadd.f32 %v316, %v320
    %v325 = vadd.f32 %v317, %v321
    %v326 = vadd.f32 %v318, %v322
    %327 = vst.msk [vmem:[%s7] sm:$0xff] %vm46, %v323
    %328 = vst.msk [vmem:[%s7 + $0x8] sm:$0xff] %vm46, %v324
    %329 = vst.msk [vmem:[%s7 + $0x10] sm:$0xff] %vm46, %v325
    %330 = vst.msk [vmem:[%s7 + $0x18] sm:$0xff] %vm46, %v326
    %v331 = vmul.f32 %v165, %v165
    %v332 = vsel %vm82, %v331, 0.0
    %333 = vadd.xlane.f32.xlu0 %v332
    %v334 = vpop.xlane.xlu0 %333
    %v335 = vrsqrt.pop %v334
    %v336 = vmul.f32 %v334, %v335
    %vm337 = vcmp.eq.f32.partialorder %v334, inf
    %v338 = vsel %vm337, %v334, %v336
    %vm339 = vcmp.eq.f32.partialorder %v334, 0.0
    %v340 = vand.u32 %v334, 2147483648
    %v341 = vsel %vm339, %v340, %v338
    %v342 = vadd.f32 %v341, 1e-12
    %v343 = vrcp.pop %v342
    %v344 = vmul.f32 %v165, %v343
    %v345 = vmul.f32 %v323, %v323
    %v346 = vmul.f32 %v324, %v324
    %v347 = vmul.f32 %v325, %v325
    %v348 = vmul.f32 %v326, %v326
    %v349 = vsel %vm46, %v345, 0.0
    %v350 = vsel %vm46, %v346, 0.0
    %v351 = vadd.f32 %v349, %v350
    %v352 = vsel %vm46, %v347, 0.0
    %v353 = vadd.f32 %v351, %v352
    %v354 = vsel %vm46, %v348, 0.0
    %v355 = vadd.f32 %v353, %v354
    %v356 = vrot.slane %v355, 4
    %v357 = vadd.f32 %v355, %v356
    %v358 = vrot.slane %v357, 2
    %v359 = vadd.f32 %v357, %v358
    %v360 = vrot.slane %v359, 1
    %v361 = vadd.f32 %v359, %v360
    %v362 = vrsqrt.pop %v361
    %v363 = vmul.f32 %v361, %v362
    %vm364 = vcmp.eq.f32.partialorder %v361, inf
    %v365 = vsel %vm364, %v361, %v363
    %vm366 = vcmp.eq.f32.partialorder %v361, 0.0
    %v367 = vand.u32 %v361, 2147483648
    %v368 = vsel %vm366, %v367, %v365
    %v369 = vadd.f32 %v368, 1e-12
    %v370 = vrcp.pop %v369
    %v371 = vmul.f32 %v323, %v370
    %v372 = vmul.f32 %v324, %v370
    %v373 = vmul.f32 %v325, %v370
    %v374 = vmul.f32 %v326, %v370
    %v376 = vsel %vm82, %v344, 0
    %378 = vmatprep.subr.mxu0 0.0
    %379 = vmatpush1.msra.mxu0 %v371
    %380 = vmatprep.subr.mxu0 0.0
    %381 = vmatpush1.msra.mxu0 %v372
    %382 = vmatprep.subr.mxu0 0.0
    %383 = vmatpush1.msra.mxu0 %v373
    %384 = vmatprep.subr.mxu0 0.0
    %385 = vmatpush1.msra.mxu0 %v374
    %386 = vmatprep.subr.mxu0 0.0
    %387 = vmatpush1.msra.mxu0 0.0
    %388 = vmatprep.subr.mxu0 0.0
    %389 = vmatpush1.msra.mxu0 0.0
    %390 = vmatprep.subr.mxu0 0.0
    %391 = vmatpush1.msra.mxu0 0.0
    %392 = vmatprep.subr.mxu0 0.0
    %393 = vmatpush1.msra.mxu0 0.0
    %394 = vmatprep.subr.mxu0 0.0
    %395 = vmatpush1.msra.mxu0 0.0
    %396 = vmatprep.subr.mxu0 0.0
    %397 = vmatpush1.msra.mxu0 0.0
    %398 = vmatprep.subr.mxu0 0.0
    %399 = vmatpush1.msra.mxu0 0.0
    %400 = vmatprep.subr.mxu0 0.0
    %401 = vmatpush1.msra.mxu0 0.0
    %402 = vmatprep.subr.mxu0 0.0
    %403 = vmatpush1.msra.mxu0 0.0
    %404 = vmatprep.subr.mxu0 0.0
    %405 = vmatpush1.msra.mxu0 0.0
    %406 = vmatprep.subr.mxu0 0.0
    %407 = vmatpush1.msra.mxu0 0.0
    %408 = vmatprep.subr.mxu0 0.0
    %409 = vmatpush1.msra.mxu0 0.0
    %410 = vmatprep.subr.mxu0 0.0
    %411 = vmatpush1.msra.mxu0 0.0
    %412 = vmatprep.subr.mxu0 0.0
    %413 = vmatpush1.msra.mxu0 0.0
    %414 = vmatprep.subr.mxu0 0.0
    %415 = vmatpush1.msra.mxu0 0.0
    %416 = vmatprep.subr.mxu0 0.0
    %417 = vmatpush1.msra.mxu0 0.0
    %418 = vmatprep.subr.mxu0 0.0
    %419 = vmatpush1.msra.mxu0 0.0
    %420 = vmatprep.subr.mxu0 0.0
    %421 = vmatpush1.msra.mxu0 0.0
    %422 = vmatprep.subr.mxu0 0.0
    %423 = vmatpush1.msra.mxu0 0.0
    %424 = vmatprep.subr.mxu0 0.0
    %425 = vmatpush1.msra.mxu0 0.0
    %426 = vmatprep.subr.mxu0 0.0
    %427 = vmatpush1.msra.mxu0 0.0
    %428 = vmatprep.subr.mxu0 0.0
    %429 = vmatpush1.msra.mxu0 0.0
    %430 = vmatprep.subr.mxu0 0.0
    %431 = vmatpush1.msra.mxu0 0.0
    %432 = vmatprep.subr.mxu0 0.0
    %433 = vmatpush1.msra.mxu0 0.0
    %434 = vmatprep.subr.mxu0 0.0
    %435 = vmatpush1.msra.mxu0 0.0
    %436 = vmatprep.subr.mxu0 0.0
    %437 = vmatpush1.msra.mxu0 0.0
    %438 = vmatprep.subr.mxu0 0.0
    %439 = vmatpush1.msra.mxu0 0.0
    %440 = vmatprep.subr.mxu0 0.0
    %441 = vmatpush1.msra.mxu0 0.0
    %442 = vmatprep.mubr.f32.mxu0 0.0
    %443 = vmatmul.mubr.f32.gmra.mrb[0].mxu0 %v376
    %v444 = vpop.f32.mrb[0].mxu0
    %v445 = vadd.f32 0.0, %v444
    %v446 = vpop.f32.mrb[0].mxu0
    %447 = vdwg.mxu0
    %v448 = vmul.f32 %v445, 8.0
    %v449 = vsel %vm46, %v448, -inf
    %450 = vmax.xlane.f32.xlu0 %v449
    %v451 = vpop.xlane.xlu0 %450
    %v452 = vsub.f32 %v448, %v451
    %v453 = vmul.f32 %v452, 1.442695
    %v454 = vpow.pop %v453
    %v455 = vsel %vm46, %v454, 0.0
    %456 = vadd.xlane.f32.xlu0 %v455
    %v457 = vpop.xlane.xlu0 %456
    %v458 = vlog2.pop %v457
    %v459 = vmul.f32 %v458, 0.6931472
    %v460 = vadd.f32 %v459, %v451
    %v461 = vmul.f32 %v448, %v45
    %v462 = vsel %vm46, %v461, 0.0
    %463 = vadd.xlane.f32.xlu0 %v462
    %v464 = vpop.xlane.xlu0 %463
    %v465 = vsub.f32 %v460, %v464
    %vm466 = vcmask 7168
    %v467 = vsel %vm466, %v465, 0.0
    %468 = vadd.xlane.f32.xlu0 %v467
    %v469 = vpop.xlane.xlu0 %468
    %v470 = vrot.slane %v469, 4
    %v471 = vadd.f32 %v469, %v470
    %v472 = vrot.slane %v471, 2
    %v473 = vadd.f32 %v471, %v472
    %v474 = vrot.slane %v473, 1
    %v475 = vadd.f32 %v473, %v474
    %s476 = vtos %v475
    %s477 = smul.f32 %s476, 0.125
    %s478 = scalar_lea.smem [#allocation2], 0
    %479 = sst [smem:[%s478]] %s477
    // Predicated region
    $region26: #{tpu_custom_call.1} parent=1 // pred_check
      _
    $region27: #{tpu_custom_call.1} parent=1 // pred_check_branch
      %481 = sbr.rel (0) target = $region29
    $region28: #{tpu_custom_call.1} parent=1 // pred_region
      %s483 = ssub.s32 16, 16
      %484 = vsyncadd [#allocation3], %s483
      %487 = dma.smem_to_hbm [#allocation2], 16, %s6, [#allocation3]
    $region29: #{tpu_custom_call.1} parent=1 // pred_fallthru
      _
    // Predicated region
    $region30: #{tpu_custom_call.1} parent=1 // pred_check
      _
    $region31: #{tpu_custom_call.1} parent=1 // pred_check_branch
      %489 = sbr.rel (0) target = $region33
    $region32: #{tpu_custom_call.1} parent=1 // pred_region
      _
    $region33: #{tpu_custom_call.1} parent=1 // pred_fallthru
      _
    // Predicated region
    $region34: #{tpu_custom_call.1} parent=1 // pred_check
      _
    $region35: #{tpu_custom_call.1} parent=1 // pred_check_branch
      %491 = sbr.rel (0) target = $region37
    $region36: #{tpu_custom_call.1} parent=1 // pred_region
      %492 = dma.done [#allocation3], 16
    $region37: #{tpu_custom_call.1} parent=1 // pred_fallthru
      _
    // Predicated region
    $region38: #{tpu_custom_call.1} parent=1 // pred_check
      _
    $region39: #{tpu_custom_call.1} parent=1 // pred_check_branch
      %494 = sbr.rel (0) target = $region41
    $region40: #{tpu_custom_call.1} parent=1 // pred_region
      _
    $region41: #{tpu_custom_call.1} parent=1 // pred_fallthru
      _
    %495 = sfence
    %496 = vsyncpa [#allocation3], 1

</llo_original>
